<compile_context>
chip_gen: v6e
topology: v6e:2x2x1
jax: 0.10.0
libtpu: 0.0.40
codegen_flags: <defaults>
</compile_context>

<pallas_src>
import functools
import math

import jax
import jax.numpy as jnp
from jax.experimental import pallas as pl
from jax.experimental.pallas import tpu as pltpu

BN_EPS = 1e-5
INV_SQRT2 = 0.7071067811865476


def _conv_gelu_pool_kernel(m_valid, p_ref, w_hi_ref, w_lo_ref, b_ref,
                           pooled_ref, sum_ref, sumsq_ref):
    """Per lane-tile: conv matmul + bias + exact GELU + 2x2 max-pool + partial BN stats.

    p_ref:      (4, K, TM) f32  -- im2col patches of the 4 pool positions of TM pooled pixels
    w_hi_ref / w_lo_ref: (Cout, K) bf16 -- hi/lo split of the f32 conv weight
    b_ref:      (Cout, 1) f32
    pooled_ref: (Cout, TM) f32  -- pooled (pre-BN) activations, pixels on lanes
    sum_ref / sumsq_ref: (1, Cout, 1) f32 -- masked per-tile partial statistics
    """
    i = pl.program_id(0)
    cout = pooled_ref.shape[0]
    tm = pooled_ref.shape[1]

    w_hi = w_hi_ref[...]
    w_lo = w_lo_ref[...]
    b = b_ref[...]                                            # (Cout, 1)

    pooled = None
    for pos in range(4):                                      # static unroll over 2x2 window
        p = p_ref[pos]                                        # (K, TM) f32, lane-dense
        p_hi = p.astype(jnp.bfloat16)
        p_lo = (p - p_hi.astype(jnp.float32)).astype(jnp.bfloat16)
        # f32-accurate conv matmul as 3 bf16 MXU passes (lo*lo term dropped, err ~1e-5).
        y = jnp.dot(w_hi, p_hi, preferred_element_type=jnp.float32)
        y = y + jnp.dot(w_lo, p_hi, preferred_element_type=jnp.float32)
        y = y + jnp.dot(w_hi, p_lo, preferred_element_type=jnp.float32)
        y = y + b                                             # conv bias
        # exact GELU (PyTorch nn.GELU default): x * 0.5 * (1 + erf(x/sqrt(2)))  (EUP + VPU)
        y = y * (0.5 * jax.lax.erf(y * INV_SQRT2) + 0.5)
        # MaxPool2d(2,2): elementwise max across the 4 pool positions (cheap VPU work).
        pooled = y if pooled is None else jnp.maximum(pooled, y)
    pooled_ref[...] = pooled

    # Masked per-tile BN partial statistics (padded remainder columns excluded).
    col = i * tm + jax.lax.broadcasted_iota(jnp.int32, (cout, tm), 1)
    valid = (col < m_valid).astype(jnp.float32)
    pm = pooled * valid
    sum_ref[...] = jnp.sum(pm, axis=1, keepdims=True)[None]
    sumsq_ref[...] = jnp.sum(pm * pooled, axis=1, keepdims=True)[None]


def _bn_finalize_kernel(m_valid, sum_ref, sumsq_ref, pooled_ref, out_ref):
    """Reduce per-tile partials to batch statistics and normalize one pooled lane-tile.

    sum_ref / sumsq_ref: (num_tiles, Cout, 1) f32 (full); pooled_ref / out_ref: (Cout, TM) f32
    """
    inv_m = 1.0 / float(m_valid)
    mean = jnp.sum(sum_ref[...], axis=0) * inv_m              # (Cout, 1)
    ex2 = jnp.sum(sumsq_ref[...], axis=0) * inv_m             # (Cout, 1)
    var = ex2 - mean * mean                                   # biased variance (training BN)
    inv_std = jax.lax.rsqrt(var + BN_EPS)
    out_ref[...] = (pooled_ref[...] - mean) * inv_std


def _vmem_capacity_bytes():
    """Per-core VMEM capacity (v5e/v6e: 128 MiB, v7x: 64 MiB), with a conservative fallback."""
    try:
        return int(pltpu.get_tpu_info().vmem_capacity_bytes)
    except Exception:
        return 64 << 20


def _pick_block_cols(K, Cout, vmem_limit):
    """Largest lane tile whose double-buffered blocks + f32/bf16 temporaries fit in VMEM."""
    k_sub = pl.cdiv(K, 8) * 8                 # sublane padding of the VMEM layout
    c_sub = pl.cdiv(Cout, 8) * 8
    bytes_per_col = (
        2 * (4 * k_sub * 4 + c_sub * 4)       # double-buffered patch + pooled blocks
        + 4 * k_sub * (4 + 2 + 2)             # in-kernel f32 patch view + bf16 hi/lo copies
        + 8 * c_sub * 4                       # matmul / GELU / pool f32 temporaries
    )
    tm = (vmem_limit * 6 // 10) // bytes_per_col
    return int(max(128, min(4096, (tm // 128) * 128)))


def conv_block_forward(x_nchw, w_oihw, bias, *, block_cols=None):
    """ConvBlock forward. x_nchw: (N, Cin, H, W) f32 -> (N, Cout, H//2, W//2) f32."""
    N, Cin, H, W = x_nchw.shape
    Cout = w_oihw.shape[0]
    assert H % 2 == 0 and W % 2 == 0
    H2, W2 = H // 2, W // 2
    K = 9 * Cin
    M = N * H2 * W2

    vmem_cap = _vmem_capacity_bytes()
    vmem_limit = int(max(32 << 20, min(vmem_cap * 3 // 4, 48 << 20)))
    if block_cols is None:
        block_cols = _pick_block_cols(K, Cout, vmem_limit)
    tm = max(128, (int(block_cols) // 128) * 128)     # lane tiles must be 128-aligned
    tm = min(tm, pl.cdiv(M, 128) * 128)               # never pad beyond one tile's worth
    num_tiles = pl.cdiv(M, tm)
    m_pad = num_tiles * tm

    # ---- glue (pure layout): pad -> 9 shifted views -> (pool_pos, k, pooled_pixel) ----
    xp = jnp.pad(x_nchw, ((0, 0), (0, 0), (1, 1), (1, 1)))        # (N, Cin, H+2, W+2)
    shifted = [xp[:, :, ky:ky + H, kx:kx + W] for ky in range(3) for kx in range(3)]
    pat = jnp.stack(shifted, axis=0)                              # (9, N, Cin, H, W)
    pat = pat.reshape(9, N, Cin, H2, 2, W2, 2)                    # (kk, n, ci, ph, dy, pw, dx)
    pat = jnp.transpose(pat, (4, 6, 0, 2, 1, 3, 5))               # (dy, dx, kk, ci, n, ph, pw)
    pat = pat.reshape(4, K, M).astype(jnp.float32)                # K order = (ky, kx, ci)
    if m_pad > M:
        pat = jnp.pad(pat, ((0, 0), (0, 0), (0, m_pad - M)))

    # Conv weight (Cout, Cin, 3, 3) -> (Cout, K), split into bf16 hi/lo for the 3-pass matmul.
    wmat = jnp.transpose(w_oihw, (0, 2, 3, 1)).reshape(Cout, K).astype(jnp.float32)
    w_hi = wmat.astype(jnp.bfloat16)
    w_lo = (wmat - w_hi.astype(jnp.float32)).astype(jnp.bfloat16)
    bmat = bias.reshape(Cout, 1).astype(jnp.float32)

    compiler_params = pltpu.CompilerParams(
        dimension_semantics=("parallel",),        # lane tiles are independent (megacore v7x)
        vmem_limit_bytes=vmem_limit,
    )

    # ---- pass 1: conv matmul + bias + GELU + max-pool + masked partial BN stats ----
    pooled, sums, sumsqs = pl.pallas_call(
        functools.partial(_conv_gelu_pool_kernel, M),
        grid=(num_tiles,),
        in_specs=[
            pl.BlockSpec((4, K, tm), lambda i: (0, 0, i)),
            pl.BlockSpec((Cout, K), lambda i: (0, 0)),
            pl.BlockSpec((Cout, K), lambda i: (0, 0)),
            pl.BlockSpec((Cout, 1), lambda i: (0, 0)),
        ],
        out_specs=(
            pl.BlockSpec((Cout, tm), lambda i: (0, i)),
            pl.BlockSpec((1, Cout, 1), lambda i: (i, 0, 0)),
            pl.BlockSpec((1, Cout, 1), lambda i: (i, 0, 0)),
        ),
        out_shape=(
            jax.ShapeDtypeStruct((Cout, m_pad), jnp.float32),
            jax.ShapeDtypeStruct((num_tiles, Cout, 1), jnp.float32),
            jax.ShapeDtypeStruct((num_tiles, Cout, 1), jnp.float32),
        ),
        compiler_params=compiler_params,
        cost_estimate=pl.CostEstimate(
            flops=int(3 * 2 * 4 * m_pad * K * Cout + 16 * 4 * m_pad * Cout),
            transcendentals=int(4 * m_pad * Cout),
            bytes_accessed=int(4 * m_pad * K * 4 + m_pad * Cout * 4
                               + 2 * num_tiles * Cout * 4 + 2 * K * Cout * 2 + Cout * 4),
        ),
    )(pat, w_hi, w_lo, bmat)

    # ---- pass 2: reduce partial stats and apply BatchNorm (affine=False, batch stats) ----
    out_flat = pl.pallas_call(
        functools.partial(_bn_finalize_kernel, M),
        grid=(num_tiles,),
        in_specs=[
            pl.BlockSpec((num_tiles, Cout, 1), lambda i: (0, 0, 0)),
            pl.BlockSpec((num_tiles, Cout, 1), lambda i: (0, 0, 0)),
            pl.BlockSpec((Cout, tm), lambda i: (0, i)),
        ],
        out_specs=pl.BlockSpec((Cout, tm), lambda i: (0, i)),
        out_shape=jax.ShapeDtypeStruct((Cout, m_pad), jnp.float32),
        compiler_params=compiler_params,
        cost_estimate=pl.CostEstimate(
            flops=int(4 * m_pad * Cout),
            transcendentals=int(Cout),
            bytes_accessed=int(2 * m_pad * Cout * 4 + 4 * num_tiles * Cout * 4),
        ),
    )(sums, sumsqs, pooled)

    # columns are (n, ph, pw)-major -> back to NCHW
    out = out_flat[:, :M].reshape(Cout, N, H2, W2)
    return jnp.transpose(out, (1, 0, 2, 3))


def reference_forward(x_nchw, w_oihw, bias):
    """Pure-JAX reference matching PyTorch ConvBlock.forward (training-mode BatchNorm)."""
    N, Cin, H, W = x_nchw.shape
    Cout = w_oihw.shape[0]
    y = jax.lax.conv_general_dilated(
        x_nchw, w_oihw, window_strides=(1, 1), padding=((1, 1), (1, 1)),
        dimension_numbers=("NCHW", "OIHW", "NCHW"),
        precision=jax.lax.Precision.HIGHEST,
    ) + bias[None, :, None, None]
    y = 0.5 * y * (1.0 + jax.lax.erf(y * INV_SQRT2))                    # exact GELU
    y = y.reshape(N, Cout, H // 2, 2, W // 2, 2).max(axis=(3, 5))       # MaxPool2d(2, 2)
    mean = y.mean(axis=(0, 2, 3), keepdims=True)
    var = y.var(axis=(0, 2, 3), keepdims=True)                          # biased var (training BN)
    return (y - mean) / jnp.sqrt(var + BN_EPS)


if __name__ == "__main__":
    # Small shapes consistent with ConvBlock(inplane=4, outplane=8)
    N, Cin, Cout, H, W = 2, 4, 8, 16, 16

    key = jax.random.PRNGKey(0)
    kx, kw, kb, kx2 = jax.random.split(key, 4)
    x = jax.random.normal(kx, (N, Cin, H, W), dtype=jnp.float32)
    fan_in = Cin * 3 * 3
    bound = 1.0 / math.sqrt(fan_in)
    w = jax.random.uniform(kw, (Cout, Cin, 3, 3), jnp.float32, -bound, bound)
    b = jax.random.uniform(kb, (Cout,), jnp.float32, -bound, bound)

    fwd = jax.jit(conv_block_forward, static_argnames=("block_cols",))

    # main shape: single lane tile, auto tile size
    ref = jax.block_until_ready(reference_forward(x, w, b))
    out = jax.block_until_ready(fwd(x, w, b))
    assert out.shape == (N, Cout, H // 2, W // 2), out.shape
    assert bool(jnp.all(jnp.isfinite(out)))
    err = float(jnp.max(jnp.abs(out - ref)))
    assert bool(jnp.allclose(out, ref, rtol=1e-3, atol=1e-3)), err

    # odd batch + forced 128-column tiles: exercises multi-tile grid + remainder masking
    x2 = jax.random.normal(kx2, (3, Cin, H, W), dtype=jnp.float32)
    ref2 = jax.block_until_ready(reference_forward(x2, w, b))
    out2 = jax.block_until_ready(fwd(x2, w, b, block_cols=128))
    assert out2.shape == (3, Cout, H // 2, W // 2), out2.shape
    assert bool(jnp.all(jnp.isfinite(out2)))
    err2 = float(jnp.max(jnp.abs(out2 - ref2)))
    assert bool(jnp.allclose(out2, ref2, rtol=1e-3, atol=1e-3)), err2

    print("KERNEL_OK")
</pallas_src>

<mosaic_0001>
module attributes {stable_mosaic.version = 11 : i64} {
  func.func @_conv_gelu_pool_kernel(%arg0: i32, %arg1: memref<4x36x128xf32, #tpu.memory_space<vmem>>, %arg2: memref<8x36xbf16, #tpu.memory_space<vmem>>, %arg3: memref<8x36xbf16, #tpu.memory_space<vmem>>, %arg4: memref<8x1xf32, #tpu.memory_space<vmem>>, %arg5: memref<8x128xf32, #tpu.memory_space<vmem>>, %arg6: memref<1x8x1xf32, #tpu.memory_space<vmem>>, %arg7: memref<1x8x1xf32, #tpu.memory_space<vmem>>) attributes {dimension_semantics = [#tpu.dimension_semantics<parallel>], iteration_bounds = array<i64: 1>, scalar_prefetch = 0 : i64, scratch_operands = 0 : i64, tpu.core_type = #tpu.core_type<tc>, window_params = [{transform_indices = @transform_0, window_bounds = array<i64: 4, 36, 128>}, {pipeline_mode = #tpu.pipeline_mode<synchronous>, transform_indices = @transform_1, window_bounds = array<i64: 8, 36>}, {pipeline_mode = #tpu.pipeline_mode<synchronous>, transform_indices = @transform_2, window_bounds = array<i64: 8, 36>}, {pipeline_mode = #tpu.pipeline_mode<synchronous>, transform_indices = @transform_3, window_bounds = array<i64: 8, 1>}, {transform_indices = @transform_4, window_bounds = array<i64: 8, 128>}, {transform_indices = @transform_5, window_bounds = array<i64: 1, 8, 1>}, {transform_indices = @transform_6, window_bounds = array<i64: 1, 8, 1>}]} {
    %c0 = arith.constant 0 : index
    %c0_0 = arith.constant 0 : index
    %0 = vector.load %arg2[%c0, %c0_0] : memref<8x36xbf16, #tpu.memory_space<vmem>>, vector<8x36xbf16>
    %c0_1 = arith.constant 0 : index
    %c0_2 = arith.constant 0 : index
    %1 = vector.load %arg3[%c0_1, %c0_2] : memref<8x36xbf16, #tpu.memory_space<vmem>>, vector<8x36xbf16>
    %c0_3 = arith.constant 0 : index
    %c0_4 = arith.constant 0 : index
    %2 = vector.load %arg4[%c0_3, %c0_4] : memref<8x1xf32, #tpu.memory_space<vmem>>, vector<8x1xf32>
    %c0_5 = arith.constant 0 : index
    %c0_6 = arith.constant 0 : index
    %c0_7 = arith.constant 0 : index
    %3 = vector.load %arg1[%c0_5, %c0_6, %c0_7] : memref<4x36x128xf32, #tpu.memory_space<vmem>>, vector<1x36x128xf32>
    %4 = vector.shape_cast %3 : vector<1x36x128xf32> to vector<36x128xf32>
    %5 = arith.truncf %4 : vector<36x128xf32> to vector<36x128xbf16>
    %6 = arith.extf %5 : vector<36x128xbf16> to vector<36x128xf32>
    %7 = arith.subf %4, %6 : vector<36x128xf32>
    %8 = arith.truncf %7 : vector<36x128xf32> to vector<36x128xbf16>
    %cst = arith.constant dense<0.000000e+00> : vector<8x128xf32>
    %9 = tpu.matmul %0, %5, %cst {dimension_numbers = #tpu.dot_dimension_numbers<[1], [0], [0], [1], [0, 0, 1, 1], [], []>} : vector<8x36xbf16>, vector<36x128xbf16>, vector<8x128xf32> -> vector<8x128xf32>
    %cst_8 = arith.constant dense<0.000000e+00> : vector<8x128xf32>
    %10 = tpu.matmul %1, %5, %cst_8 {dimension_numbers = #tpu.dot_dimension_numbers<[1], [0], [0], [1], [0, 0, 1, 1], [], []>} : vector<8x36xbf16>, vector<36x128xbf16>, vector<8x128xf32> -> vector<8x128xf32>
    %11 = arith.addf %9, %10 : vector<8x128xf32>
    %cst_9 = arith.constant dense<0.000000e+00> : vector<8x128xf32>
    %12 = tpu.matmul %0, %8, %cst_9 {dimension_numbers = #tpu.dot_dimension_numbers<[1], [0], [0], [1], [0, 0, 1, 1], [], []>} : vector<8x36xbf16>, vector<36x128xbf16>, vector<8x128xf32> -> vector<8x128xf32>
    %13 = arith.addf %11, %12 : vector<8x128xf32>
    %14 = vector.broadcast %2 : vector<8x1xf32> to vector<8x128xf32>
    %15 = arith.addf %13, %14 : vector<8x128xf32>
    %cst_10 = arith.constant 0.707106769 : f32
    %16 = vector.broadcast %cst_10 : f32 to vector<8x128xf32>
    %17 = arith.mulf %15, %16 : vector<8x128xf32>
    %18 = math.erf %17 : vector<8x128xf32>
    %cst_11 = arith.constant 5.000000e-01 : f32
    %19 = vector.broadcast %cst_11 : f32 to vector<8x128xf32>
    %20 = arith.mulf %19, %18 : vector<8x128xf32>
    %cst_12 = arith.constant 5.000000e-01 : f32
    %21 = vector.broadcast %cst_12 : f32 to vector<8x128xf32>
    %22 = arith.addf %20, %21 : vector<8x128xf32>
    %23 = arith.mulf %15, %22 : vector<8x128xf32>
    %c1 = arith.constant 1 : index
    %c0_13 = arith.constant 0 : index
    %c0_14 = arith.constant 0 : index
    %24 = vector.load %arg1[%c1, %c0_13, %c0_14] : memref<4x36x128xf32, #tpu.memory_space<vmem>>, vector<1x36x128xf32>
    %25 = vector.shape_cast %24 : vector<1x36x128xf32> to vector<36x128xf32>
    %26 = arith.truncf %25 : vector<36x128xf32> to vector<36x128xbf16>
    %27 = arith.extf %26 : vector<36x128xbf16> to vector<36x128xf32>
    %28 = arith.subf %25, %27 : vector<36x128xf32>
    %29 = arith.truncf %28 : vector<36x128xf32> to vector<36x128xbf16>
    %cst_15 = arith.constant dense<0.000000e+00> : vector<8x128xf32>
    %30 = tpu.matmul %0, %26, %cst_15 {dimension_numbers = #tpu.dot_dimension_numbers<[1], [0], [0], [1], [0, 0, 1, 1], [], []>} : vector<8x36xbf16>, vector<36x128xbf16>, vector<8x128xf32> -> vector<8x128xf32>
    %cst_16 = arith.constant dense<0.000000e+00> : vector<8x128xf32>
    %31 = tpu.matmul %1, %26, %cst_16 {dimension_numbers = #tpu.dot_dimension_numbers<[1], [0], [0], [1], [0, 0, 1, 1], [], []>} : vector<8x36xbf16>, vector<36x128xbf16>, vector<8x128xf32> -> vector<8x128xf32>
    %32 = arith.addf %30, %31 : vector<8x128xf32>
    %cst_17 = arith.constant dense<0.000000e+00> : vector<8x128xf32>
    %33 = tpu.matmul %0, %29, %cst_17 {dimension_numbers = #tpu.dot_dimension_numbers<[1], [0], [0], [1], [0, 0, 1, 1], [], []>} : vector<8x36xbf16>, vector<36x128xbf16>, vector<8x128xf32> -> vector<8x128xf32>
    %34 = arith.addf %32, %33 : vector<8x128xf32>
    %35 = vector.broadcast %2 : vector<8x1xf32> to vector<8x128xf32>
    %36 = arith.addf %34, %35 : vector<8x128xf32>
    %cst_18 = arith.constant 0.707106769 : f32
    %37 = vector.broadcast %cst_18 : f32 to vector<8x128xf32>
    %38 = arith.mulf %36, %37 : vector<8x128xf32>
    %39 = math.erf %38 : vector<8x128xf32>
    %cst_19 = arith.constant 5.000000e-01 : f32
    %40 = vector.broadcast %cst_19 : f32 to vector<8x128xf32>
    %41 = arith.mulf %40, %39 : vector<8x128xf32>
    %cst_20 = arith.constant 5.000000e-01 : f32
    %42 = vector.broadcast %cst_20 : f32 to vector<8x128xf32>
    %43 = arith.addf %41, %42 : vector<8x128xf32>
    %44 = arith.mulf %36, %43 : vector<8x128xf32>
    %45 = arith.maximumf %23, %44 : vector<8x128xf32>
    %c2 = arith.constant 2 : index
    %c0_21 = arith.constant 0 : index
    %c0_22 = arith.constant 0 : index
    %46 = vector.load %arg1[%c2, %c0_21, %c0_22] : memref<4x36x128xf32, #tpu.memory_space<vmem>>, vector<1x36x128xf32>
    %47 = vector.shape_cast %46 : vector<1x36x128xf32> to vector<36x128xf32>
    %48 = arith.truncf %47 : vector<36x128xf32> to vector<36x128xbf16>
    %49 = arith.extf %48 : vector<36x128xbf16> to vector<36x128xf32>
    %50 = arith.subf %47, %49 : vector<36x128xf32>
    %51 = arith.truncf %50 : vector<36x128xf32> to vector<36x128xbf16>
    %cst_23 = arith.constant dense<0.000000e+00> : vector<8x128xf32>
    %52 = tpu.matmul %0, %48, %cst_23 {dimension_numbers = #tpu.dot_dimension_numbers<[1], [0], [0], [1], [0, 0, 1, 1], [], []>} : vector<8x36xbf16>, vector<36x128xbf16>, vector<8x128xf32> -> vector<8x128xf32>
    %cst_24 = arith.constant dense<0.000000e+00> : vector<8x128xf32>
    %53 = tpu.matmul %1, %48, %cst_24 {dimension_numbers = #tpu.dot_dimension_numbers<[1], [0], [0], [1], [0, 0, 1, 1], [], []>} : vector<8x36xbf16>, vector<36x128xbf16>, vector<8x128xf32> -> vector<8x128xf32>
    %54 = arith.addf %52, %53 : vector<8x128xf32>
    %cst_25 = arith.constant dense<0.000000e+00> : vector<8x128xf32>
    %55 = tpu.matmul %0, %51, %cst_25 {dimension_numbers = #tpu.dot_dimension_numbers<[1], [0], [0], [1], [0, 0, 1, 1], [], []>} : vector<8x36xbf16>, vector<36x128xbf16>, vector<8x128xf32> -> vector<8x128xf32>
    %56 = arith.addf %54, %55 : vector<8x128xf32>
    %57 = vector.broadcast %2 : vector<8x1xf32> to vector<8x128xf32>
    %58 = arith.addf %56, %57 : vector<8x128xf32>
    %cst_26 = arith.constant 0.707106769 : f32
    %59 = vector.broadcast %cst_26 : f32 to vector<8x128xf32>
    %60 = arith.mulf %58, %59 : vector<8x128xf32>
    %61 = math.erf %60 : vector<8x128xf32>
    %cst_27 = arith.constant 5.000000e-01 : f32
    %62 = vector.broadcast %cst_27 : f32 to vector<8x128xf32>
    %63 = arith.mulf %62, %61 : vector<8x128xf32>
    %cst_28 = arith.constant 5.000000e-01 : f32
    %64 = vector.broadcast %cst_28 : f32 to vector<8x128xf32>
    %65 = arith.addf %63, %64 : vector<8x128xf32>
    %66 = arith.mulf %58, %65 : vector<8x128xf32>
    %67 = arith.maximumf %45, %66 : vector<8x128xf32>
    %c3 = arith.constant 3 : index
    %c0_29 = arith.constant 0 : index
    %c0_30 = arith.constant 0 : index
    %68 = vector.load %arg1[%c3, %c0_29, %c0_30] : memref<4x36x128xf32, #tpu.memory_space<vmem>>, vector<1x36x128xf32>
    %69 = vector.shape_cast %68 : vector<1x36x128xf32> to vector<36x128xf32>
    %70 = arith.truncf %69 : vector<36x128xf32> to vector<36x128xbf16>
    %71 = arith.extf %70 : vector<36x128xbf16> to vector<36x128xf32>
    %72 = arith.subf %69, %71 : vector<36x128xf32>
    %73 = arith.truncf %72 : vector<36x128xf32> to vector<36x128xbf16>
    %cst_31 = arith.constant dense<0.000000e+00> : vector<8x128xf32>
    %74 = tpu.matmul %0, %70, %cst_31 {dimension_numbers = #tpu.dot_dimension_numbers<[1], [0], [0], [1], [0, 0, 1, 1], [], []>} : vector<8x36xbf16>, vector<36x128xbf16>, vector<8x128xf32> -> vector<8x128xf32>
    %cst_32 = arith.constant dense<0.000000e+00> : vector<8x128xf32>
    %75 = tpu.matmul %1, %70, %cst_32 {dimension_numbers = #tpu.dot_dimension_numbers<[1], [0], [0], [1], [0, 0, 1, 1], [], []>} : vector<8x36xbf16>, vector<36x128xbf16>, vector<8x128xf32> -> vector<8x128xf32>
    %76 = arith.addf %74, %75 : vector<8x128xf32>
    %cst_33 = arith.constant dense<0.000000e+00> : vector<8x128xf32>
    %77 = tpu.matmul %0, %73, %cst_33 {dimension_numbers = #tpu.dot_dimension_numbers<[1], [0], [0], [1], [0, 0, 1, 1], [], []>} : vector<8x36xbf16>, vector<36x128xbf16>, vector<8x128xf32> -> vector<8x128xf32>
    %78 = arith.addf %76, %77 : vector<8x128xf32>
    %79 = vector.broadcast %2 : vector<8x1xf32> to vector<8x128xf32>
    %80 = arith.addf %78, %79 : vector<8x128xf32>
    %cst_34 = arith.constant 0.707106769 : f32
    %81 = vector.broadcast %cst_34 : f32 to vector<8x128xf32>
    %82 = arith.mulf %80, %81 : vector<8x128xf32>
    %83 = math.erf %82 : vector<8x128xf32>
    %cst_35 = arith.constant 5.000000e-01 : f32
    %84 = vector.broadcast %cst_35 : f32 to vector<8x128xf32>
    %85 = arith.mulf %84, %83 : vector<8x128xf32>
    %cst_36 = arith.constant 5.000000e-01 : f32
    %86 = vector.broadcast %cst_36 : f32 to vector<8x128xf32>
    %87 = arith.addf %85, %86 : vector<8x128xf32>
    %88 = arith.mulf %80, %87 : vector<8x128xf32>
    %89 = arith.maximumf %67, %88 : vector<8x128xf32>
    %c0_37 = arith.constant 0 : index
    %c0_38 = arith.constant 0 : index
    %90 = vector.load %arg5[%c0_37, %c0_38] : memref<8x128xf32, #tpu.memory_space<vmem>>, vector<8x128xf32>
    tpu.vector_store %arg5[%c0_37, %c0_38], %89 {strides = array<i32>} : memref<8x128xf32, #tpu.memory_space<vmem>>, vector<8x128xf32>,
    %c128_i32 = arith.constant 128 : i32
    %91 = arith.muli %arg0, %c128_i32 : i32
    %92 = tpu.iota {dimensions = array<i32: 1>} : vector<8x128xi32>
    %93 = vector.broadcast %91 : i32 to vector<8x128xi32>
    %94 = arith.addi %93, %92 : vector<8x128xi32>
    %c128_i32_39 = arith.constant 128 : i32
    %95 = vector.broadcast %c128_i32_39 : i32 to vector<8x128xi32>
    %96 = arith.cmpi slt, %94, %95 : vector<8x128xi32>
    %97 = arith.extui %96 : vector<8x128xi1> to vector<8x128xi32>
    %98 = arith.sitofp %97 : vector<8x128xi32> to vector<8x128xf32>
    %99 = arith.mulf %89, %98 : vector<8x128xf32>
    %cst_40 = arith.constant dense<0.000000e+00> : vector<8xf32>
    %100 = vector.multi_reduction <add>, %99, %cst_40 [1] : vector<8x128xf32> to vector<8xf32>
    %101 = vector.shape_cast %100 : vector<8xf32> to vector<8x1xf32>
    %102 = vector.shape_cast %101 : vector<8x1xf32> to vector<1x8x1xf32>
    %c0_41 = arith.constant 0 : index
    %c0_42 = arith.constant 0 : index
    %c0_43 = arith.constant 0 : index
    %103 = vector.load %arg6[%c0_41, %c0_42, %c0_43] : memref<1x8x1xf32, #tpu.memory_space<vmem>>, vector<1x8x1xf32>
    tpu.vector_store %arg6[%c0_41, %c0_42, %c0_43], %102 {strides = array<i32>} : memref<1x8x1xf32, #tpu.memory_space<vmem>>, vector<1x8x1xf32>,
    %104 = arith.mulf %99, %89 : vector<8x128xf32>
    %cst_44 = arith.constant dense<0.000000e+00> : vector<8xf32>
    %105 = vector.multi_reduction <add>, %104, %cst_44 [1] : vector<8x128xf32> to vector<8xf32>
    %106 = vector.shape_cast %105 : vector<8xf32> to vector<8x1xf32>
    %107 = vector.shape_cast %106 : vector<8x1xf32> to vector<1x8x1xf32>
    %c0_45 = arith.constant 0 : index
    %c0_46 = arith.constant 0 : index
    %c0_47 = arith.constant 0 : index
    %108 = vector.load %arg7[%c0_45, %c0_46, %c0_47] : memref<1x8x1xf32, #tpu.memory_space<vmem>>, vector<1x8x1xf32>
    tpu.vector_store %arg7[%c0_45, %c0_46, %c0_47], %107 {strides = array<i32>} : memref<1x8x1xf32, #tpu.memory_space<vmem>>, vector<1x8x1xf32>,
    return
  }
  func.func @transform_0(%arg0: i32) -> (i32, i32, i32) {
    %c0_i32 = arith.constant 0 : i32
    %c0_i32_0 = arith.constant 0 : i32
    %c0_i32_1 = arith.constant 0 : i32
    return %c0_i32, %c0_i32_0, %arg0 : i32, i32, i32
  }
  func.func @transform_1(%arg0: i32) -> (i32, i32) {
    %c0_i32 = arith.constant 0 : i32
    %c0_i32_0 = arith.constant 0 : i32
    %c0_i32_1 = arith.constant 0 : i32
    return %c0_i32, %c0_i32_0 : i32, i32
  }
  func.func @transform_2(%arg0: i32) -> (i32, i32) {
    %c0_i32 = arith.constant 0 : i32
    %c0_i32_0 = arith.constant 0 : i32
    %c0_i32_1 = arith.constant 0 : i32
    return %c0_i32, %c0_i32_0 : i32, i32
  }
  func.func @transform_3(%arg0: i32) -> (i32, i32) {
    %c0_i32 = arith.constant 0 : i32
    %c0_i32_0 = arith.constant 0 : i32
    %c0_i32_1 = arith.constant 0 : i32
    return %c0_i32, %c0_i32_0 : i32, i32
  }
  func.func @transform_4(%arg0: i32) -> (i32, i32) {
    %c0_i32 = arith.constant 0 : i32
    %c0_i32_0 = arith.constant 0 : i32
    return %c0_i32, %arg0 : i32, i32
  }
  func.func @transform_5(%arg0: i32) -> (i32, i32, i32) {
    %c0_i32 = arith.constant 0 : i32
    %c0_i32_0 = arith.constant 0 : i32
    %c0_i32_1 = arith.constant 0 : i32
    return %arg0, %c0_i32, %c0_i32_0 : i32, i32, i32
  }
  func.func @transform_6(%arg0: i32) -> (i32, i32, i32) {
    %c0_i32 = arith.constant 0 : i32
    %c0_i32_0 = arith.constant 0 : i32
    %c0_i32_1 = arith.constant 0 : i32
    return %arg0, %c0_i32, %c0_i32_0 : i32, i32, i32
  }
}

module attributes {stable_mosaic.version = 11 : i64} {
  func.func @_bn_finalize_kernel(%arg0: i32, %arg1: memref<1x8x1xf32, #tpu.memory_space<vmem>>, %arg2: memref<1x8x1xf32, #tpu.memory_space<vmem>>, %arg3: memref<8x128xf32, #tpu.memory_space<vmem>>, %arg4: memref<8x128xf32, #tpu.memory_space<vmem>>) attributes {dimension_semantics = [#tpu.dimension_semantics<parallel>], iteration_bounds = array<i64: 1>, scalar_prefetch = 0 : i64, scratch_operands = 0 : i64, tpu.core_type = #tpu.core_type<tc>, window_params = [{pipeline_mode = #tpu.pipeline_mode<synchronous>, transform_indices = @transform_0, window_bounds = array<i64: 1, 8, 1>}, {pipeline_mode = #tpu.pipeline_mode<synchronous>, transform_indices = @transform_1, window_bounds = array<i64: 1, 8, 1>}, {transform_indices = @transform_2, window_bounds = array<i64: 8, 128>}, {transform_indices = @transform_3, window_bounds = array<i64: 8, 128>}]} {
    %c0 = arith.constant 0 : index
    %c0_0 = arith.constant 0 : index
    %c0_1 = arith.constant 0 : index
    %0 = vector.load %arg1[%c0, %c0_0, %c0_1] : memref<1x8x1xf32, #tpu.memory_space<vmem>>, vector<1x8x1xf32>
    %cst = arith.constant dense<0.000000e+00> : vector<8x1xf32>
    %1 = vector.multi_reduction <add>, %0, %cst [0] : vector<1x8x1xf32> to vector<8x1xf32>
    %cst_2 = arith.constant 7.812500e-03 : f32
    %2 = vector.broadcast %cst_2 : f32 to vector<8x1xf32>
    %3 = arith.mulf %1, %2 : vector<8x1xf32>
    %c0_3 = arith.constant 0 : index
    %c0_4 = arith.constant 0 : index
    %c0_5 = arith.constant 0 : index
    %4 = vector.load %arg2[%c0_3, %c0_4, %c0_5] : memref<1x8x1xf32, #tpu.memory_space<vmem>>, vector<1x8x1xf32>
    %cst_6 = arith.constant dense<0.000000e+00> : vector<8x1xf32>
    %5 = vector.multi_reduction <add>, %4, %cst_6 [0] : vector<1x8x1xf32> to vector<8x1xf32>
    %cst_7 = arith.constant 7.812500e-03 : f32
    %6 = vector.broadcast %cst_7 : f32 to vector<8x1xf32>
    %7 = arith.mulf %5, %6 : vector<8x1xf32>
    %8 = arith.mulf %3, %3 : vector<8x1xf32>
    %9 = arith.subf %7, %8 : vector<8x1xf32>
    %cst_8 = arith.constant 9.99999974E-6 : f32
    %10 = vector.broadcast %cst_8 : f32 to vector<8x1xf32>
    %11 = arith.addf %9, %10 : vector<8x1xf32>
    %12 = math.rsqrt %11 : vector<8x1xf32>
    %c0_9 = arith.constant 0 : index
    %c0_10 = arith.constant 0 : index
    %13 = vector.load %arg3[%c0_9, %c0_10] : memref<8x128xf32, #tpu.memory_space<vmem>>, vector<8x128xf32>
    %14 = vector.broadcast %3 : vector<8x1xf32> to vector<8x128xf32>
    %15 = arith.subf %13, %14 : vector<8x128xf32>
    %16 = vector.broadcast %12 : vector<8x1xf32> to vector<8x128xf32>
    %17 = arith.mulf %15, %16 : vector<8x128xf32>
    %c0_11 = arith.constant 0 : index
    %c0_12 = arith.constant 0 : index
    %18 = vector.load %arg4[%c0_11, %c0_12] : memref<8x128xf32, #tpu.memory_space<vmem>>, vector<8x128xf32>
    tpu.vector_store %arg4[%c0_11, %c0_12], %17 {strides = array<i32>} : memref<8x128xf32, #tpu.memory_space<vmem>>, vector<8x128xf32>,
    return
  }
  func.func @transform_0(%arg0: i32) -> (i32, i32, i32) {
    %c0_i32 = arith.constant 0 : i32
    %c0_i32_0 = arith.constant 0 : i32
    %c0_i32_1 = arith.constant 0 : i32
    %c0_i32_2 = arith.constant 0 : i32
    return %c0_i32, %c0_i32_0, %c0_i32_1 : i32, i32, i32
  }
  func.func @transform_1(%arg0: i32) -> (i32, i32, i32) {
    %c0_i32 = arith.constant 0 : i32
    %c0_i32_0 = arith.constant 0 : i32
    %c0_i32_1 = arith.constant 0 : i32
    %c0_i32_2 = arith.constant 0 : i32
    return %c0_i32, %c0_i32_0, %c0_i32_1 : i32, i32, i32
  }
  func.func @transform_2(%arg0: i32) -> (i32, i32) {
    %c0_i32 = arith.constant 0 : i32
    %c0_i32_0 = arith.constant 0 : i32
    return %c0_i32, %arg0 : i32, i32
  }
  func.func @transform_3(%arg0: i32) -> (i32, i32) {
    %c0_i32 = arith.constant 0 : i32
    %c0_i32_0 = arith.constant 0 : i32
    return %c0_i32, %arg0 : i32, i32
  }
}

</mosaic_0001>

<llo_original>
// kernel: conv_block_forward.2
$region0: #{conv_block_forward.2}
  #allocation0 [shape = 'u32[]', space=smem, size = 0x4, offset = 0x4, fixed_abs, tag = 'smem constant byte address 0x4 - core index']
  #allocation1 [shape = 'u32[144,128]{1,0:T(1,128)}', space=vmem, size = 0x12000, scoped, tag = 'internal scratch']
  %s0 = inlined_call_operand.vmem [shape: f32[4,36,128], index: 0, kind: input, shape index: {}]
  %s1 = inlined_call_operand.vmem [shape: bf16[8,36], index: 1, kind: input, shape index: {}]
  %s2 = inlined_call_operand.vmem [shape: bf16[8,36], index: 2, kind: input, shape index: {}]
  %s3 = inlined_call_operand.vmem [shape: f32[8,1], index: 3, kind: input, shape index: {}]
  %s4 = inlined_call_operand.vmem [shape: f32[8,128], index: 4, kind: output, shape index: {0}]
  %s5 = inlined_call_operand.vmem [shape: f32[1,8,1], index: 5, kind: output, shape index: {1}]
  %s6 = inlined_call_operand.vmem [shape: f32[1,8,1], index: 6, kind: output, shape index: {2}]
  %7 = xla_tuple %s4, %s5, %s6
  %s8 = sld [smem:[#allocation0]]
  $region42: #{conv_block_forward.2} parent=0
    _
  %s10 = ssub.s32 1, %s8
  %s11 = scalar_select 0, %s10, %s8
  // Predicated region
  $region2: #{conv_block_forward.2} parent=0 // pred_check
    _
  $region3: #{conv_block_forward.2} parent=0 // pred_check_branch
    %13 = sbr.rel (0) target = $region5
  $region4: #{conv_block_forward.2} parent=0 // pred_region
    _
  $region5: #{conv_block_forward.2} parent=0 // pred_fallthru
    _
  // Predicated region
  $region6: #{conv_block_forward.2} parent=0 // pred_check
    _
  $region7: #{conv_block_forward.2} parent=0 // pred_check_branch
    %15 = sbr.rel (0) target = $region9
  $region8: #{conv_block_forward.2} parent=0 // pred_region
    _
  $region9: #{conv_block_forward.2} parent=0 // pred_fallthru
    _
  // Predicated region
  $region10: #{conv_block_forward.2} parent=0 // pred_check
    _
  $region11: #{conv_block_forward.2} parent=0 // pred_check_branch
    %17 = sbr.rel (0) target = $region13
  $region12: #{conv_block_forward.2} parent=0 // pred_region
    _
  $region13: #{conv_block_forward.2} parent=0 // pred_fallthru
    _
  // Predicated region
  $region14: #{conv_block_forward.2} parent=0 // pred_check
    _
  $region15: #{conv_block_forward.2} parent=0 // pred_check_branch
    %19 = sbr.rel (0) target = $region17
  $region16: #{conv_block_forward.2} parent=0 // pred_region
    _
  $region17: #{conv_block_forward.2} parent=0 // pred_fallthru
    _
  %v21 = vld [vmem:[%s1] sm:$0xf]
  %v22 = vld [vmem:[%s2] sm:$0xf]
  %v23 = vld [vmem:[%s3] sm:$0xff]
  %v24 = vld [vmem:[%s0] sm:$0xff]
  %v25 = vld [vmem:[%s0 + $0x8] sm:$0xff]
  %v26 = vld [vmem:[%s0 + $0x10] sm:$0xff]
  %v27 = vld [vmem:[%s0 + $0x18] sm:$0xff]
  %v28 = vld [vmem:[%s0 + $0x20] sm:$0xf]
  %v29 = vpack.c.bf16 %v25, %v24
  %v30 = vpack.c.bf16 %v27, %v26
  %v31 = vpack.c.bf16 %v28, %v28
  %v32 = vunpack.c.l.bf16 %v29
  %v33 = vunpack.c.h.bf16 %v29
  %v34 = vunpack.c.l.bf16 %v30
  %v35 = vunpack.c.h.bf16 %v30
  %v36 = vunpack.c.l.bf16 %v31
  %v37 = vsub.f32 %v24, %v32
  %v38 = vsub.f32 %v25, %v33
  %v39 = vsub.f32 %v26, %v34
  %v40 = vsub.f32 %v27, %v35
  %v41 = vsub.f32 %v28, %v36
  %v42 = vpack.c.bf16 %v38, %v37
  %v43 = vpack.c.bf16 %v40, %v39
  %v44 = vpack.c.bf16 %v41, %v41
  %vm45 = vcmask 293888
  %v47 = vsel %vm45, %v22, 0
  %vm49 = vcmask 1041408
  %v51 = vsel %vm49, %v31, 0
  %53 = vmatprep.subr.bf16.mxu0 0
  %54 = vmatpush1.bf16.msra.mxu0 0
  %55 = vmatprep.subr.bf16.mxu0 0
  %56 = vmatpush1.bf16.msra.mxu0 0
  %57 = vmatprep.subr.bf16.mxu0 0
  %58 = vmatpush1.bf16.msra.mxu0 0
  %59 = vmatprep.subr.bf16.mxu0 0
  %60 = vmatpush1.bf16.msra.mxu0 0
  %61 = vmatprep.subr.bf16.mxu0 0
  %62 = vmatpush1.bf16.msra.mxu0 0
  %63 = vmatprep.subr.bf16.mxu0 0
  %64 = vmatpush1.bf16.msra.mxu0 %v51
  %65 = vmatprep.subr.bf16.mxu0 0
  %66 = vmatpush1.bf16.msra.mxu0 %v30
  %67 = vmatprep.subr.bf16.mxu0 0
  %68 = vmatpush1.bf16.msra.mxu0 %v29
  %69 = vmatprep.subr.bf16.mxu0 0
  %70 = vmatpush2.bf16.msra.mxu0 0
  %71 = vmatprep.subr.bf16.mxu0 0
  %72 = vmatpush2.bf16.msra.mxu0 0
  %73 = vmatprep.subr.bf16.mxu0 0
  %74 = vmatpush2.bf16.msra.mxu0 0
  %75 = vmatprep.subr.bf16.mxu0 0
  %76 = vmatpush2.bf16.msra.mxu0 0
  %77 = vmatprep.subr.bf16.mxu0 0
  %78 = vmatpush2.bf16.msra.mxu0 0
  %79 = vmatprep.subr.bf16.mxu0 0
  %80 = vmatpush2.bf16.msra.mxu0 0
  %81 = vmatprep.subr.bf16.mxu0 0
  %82 = vmatpush2.bf16.msra.mxu0 0
  %83 = vmatprep.subr.bf16.mxu0 0
  %84 = vmatpush2.bf16.msra.mxu0 0
  %85 = vmatprep.mubr.bf16.mxu0 0
  %86 = vmatmul.mubr.bf16.gmra.mxu0 %v47
  %v87 = vpop.f32.mrf.mxu0
  %v88 = vadd.f32 0.0, %v87
  %v89 = vpop.f32.mrf.mxu0
  %v90 = vpop.f32.mrf.mxu0
  %v91 = vpop.f32.mrf.mxu0
  %92 = vdwg.mxu0
  %v94 = vsel %vm45, %v21, 0
  %96 = vmatprep.subr.bf16.mxu0 0
  %97 = vmatpush1.bf16.msra.mxu0 0
  %98 = vmatprep.subr.bf16.mxu0 0
  %99 = vmatpush1.bf16.msra.mxu0 0
  %100 = vmatprep.subr.bf16.mxu0 0
  %101 = vmatpush1.bf16.msra.mxu0 0
  %102 = vmatprep.subr.bf16.mxu0 0
  %103 = vmatpush1.bf16.msra.mxu0 0
  %104 = vmatprep.subr.bf16.mxu0 0
  %105 = vmatpush1.bf16.msra.mxu0 0
  %106 = vmatprep.subr.bf16.mxu0 0
  %107 = vmatpush1.bf16.msra.mxu0 %v51
  %108 = vmatprep.subr.bf16.mxu0 0
  %109 = vmatpush1.bf16.msra.mxu0 %v30
  %110 = vmatprep.subr.bf16.mxu0 0
  %111 = vmatpush1.bf16.msra.mxu0 %v29
  %112 = vmatprep.subr.bf16.mxu0 0
  %113 = vmatpush2.bf16.msra.mxu0 0
  %114 = vmatprep.subr.bf16.mxu0 0
  %115 = vmatpush2.bf16.msra.mxu0 0
  %116 = vmatprep.subr.bf16.mxu0 0
  %117 = vmatpush2.bf16.msra.mxu0 0
  %118 = vmatprep.subr.bf16.mxu0 0
  %119 = vmatpush2.bf16.msra.mxu0 0
  %120 = vmatprep.subr.bf16.mxu0 0
  %121 = vmatpush2.bf16.msra.mxu0 0
  %122 = vmatprep.subr.bf16.mxu0 0
  %123 = vmatpush2.bf16.msra.mxu0 0
  %124 = vmatprep.subr.bf16.mxu0 0
  %125 = vmatpush2.bf16.msra.mxu0 0
  %126 = vmatprep.subr.bf16.mxu0 0
  %127 = vmatpush2.bf16.msra.mxu0 0
  %128 = vmatprep.mubr.bf16.mxu0 0
  %129 = vmatmul.mubr.bf16.gmra.mxu0 %v94
  %v130 = vpop.f32.mrf.mxu0
  %v131 = vadd.f32 %v88, %v130
  %v132 = vpop.f32.mrf.mxu0
  %v133 = vpop.f32.mrf.mxu0
  %v134 = vpop.f32.mrf.mxu0
  %135 = vdwg.mxu0
  %v137 = vsel %vm49, %v44, 0
  %139 = vmatprep.subr.bf16.mxu0 0
  %140 = vmatpush1.bf16.msra.mxu0 0
  %141 = vmatprep.subr.bf16.mxu0 0
  %142 = vmatpush1.bf16.msra.mxu0 0
  %143 = vmatprep.subr.bf16.mxu0 0
  %144 = vmatpush1.bf16.msra.mxu0 0
  %145 = vmatprep.subr.bf16.mxu0 0
  %146 = vmatpush1.bf16.msra.mxu0 0
  %147 = vmatprep.subr.bf16.mxu0 0
  %148 = vmatpush1.bf16.msra.mxu0 0
  %149 = vmatprep.subr.bf16.mxu0 0
  %150 = vmatpush1.bf16.msra.mxu0 %v137
  %151 = vmatprep.subr.bf16.mxu0 0
  %152 = vmatpush1.bf16.msra.mxu0 %v43
  %153 = vmatprep.subr.bf16.mxu0 0
  %154 = vmatpush1.bf16.msra.mxu0 %v42
  %155 = vmatprep.subr.bf16.mxu0 0
  %156 = vmatpush2.bf16.msra.mxu0 0
  %157 = vmatprep.subr.bf16.mxu0 0
  %158 = vmatpush2.bf16.msra.mxu0 0
  %159 = vmatprep.subr.bf16.mxu0 0
  %160 = vmatpush2.bf16.msra.mxu0 0
  %161 = vmatprep.subr.bf16.mxu0 0
  %162 = vmatpush2.bf16.msra.mxu0 0
  %163 = vmatprep.subr.bf16.mxu0 0
  %164 = vmatpush2.bf16.msra.mxu0 0
  %165 = vmatprep.subr.bf16.mxu0 0
  %166 = vmatpush2.bf16.msra.mxu0 0
  %167 = vmatprep.subr.bf16.mxu0 0
  %168 = vmatpush2.bf16.msra.mxu0 0
  %169 = vmatprep.subr.bf16.mxu0 0
  %170 = vmatpush2.bf16.msra.mxu0 0
  %171 = vmatprep.mubr.bf16.mxu0 0
  %172 = vmatmul.mubr.bf16.gmra.mxu0 %v94
  %v173 = vpop.f32.mrf.mxu0
  %v174 = vadd.f32 0.0, %v173
  %v175 = vpop.f32.mrf.mxu0
  %v176 = vpop.f32.mrf.mxu0
  %v177 = vpop.f32.mrf.mxu0
  %178 = vdwg.mxu0
  %v179 = vadd.f32 %v131, %v174
  %181 = vset.pattern.permute.xlu0 0
  %182 = vperm.xlu0 %181, %v23
  %v183 = vpop.permute.xlu0 %182
  %v185 = vadd.f32 %v179, %v183
  %v186 = vmul.f32 %v185, 0.70710677
  %v187 = verf.f32.pop %v186
  %v188 = vmul.f32 %v187, 0.5
  %v189 = vadd.f32 %v188, 0.5
  %v190 = vmul.f32 %v185, %v189
  %s191 = scalar_lea.vmem %s0, 40
  %v192 = vld [vmem:[%s191] sm:$0xff]
  %v193 = vld [vmem:[%s191 + $0x8] sm:$0xff]
  %v194 = vld [vmem:[%s191 + $0x10] sm:$0xff]
  %v195 = vld [vmem:[%s191 + $0x18] sm:$0xff]
  %v196 = vld [vmem:[%s191 + $0x20] sm:$0xf]
  %v197 = vpack.c.bf16 %v193, %v192
  %v198 = vpack.c.bf16 %v195, %v194
  %v199 = vpack.c.bf16 %v196, %v196
  %v200 = vunpack.c.l.bf16 %v197
  %v201 = vunpack.c.h.bf16 %v197
  %v202 = vunpack.c.l.bf16 %v198
  %v203 = vunpack.c.h.bf16 %v198
  %v204 = vunpack.c.l.bf16 %v199
  %v205 = vsub.f32 %v192, %v200
  %v206 = vsub.f32 %v193, %v201
  %v207 = vsub.f32 %v194, %v202
  %v208 = vsub.f32 %v195, %v203
  %v209 = vsub.f32 %v196, %v204
  %v210 = vpack.c.bf16 %v206, %v205
  %v211 = vpack.c.bf16 %v208, %v207
  %v212 = vpack.c.bf16 %v209, %v209
  %v214 = vsel %vm49, %v199, 0
  %216 = vmatprep.subr.bf16.mxu0 0
  %217 = vmatpush1.bf16.msra.mxu0 0
  %218 = vmatprep.subr.bf16.mxu0 0
  %219 = vmatpush1.bf16.msra.mxu0 0
  %220 = vmatprep.subr.bf16.mxu0 0
  %221 = vmatpush1.bf16.msra.mxu0 0
  %222 = vmatprep.subr.bf16.mxu0 0
  %223 = vmatpush1.bf16.msra.mxu0 0
  %224 = vmatprep.subr.bf16.mxu0 0
  %225 = vmatpush1.bf16.msra.mxu0 0
  %226 = vmatprep.subr.bf16.mxu0 0
  %227 = vmatpush1.bf16.msra.mxu0 %v214
  %228 = vmatprep.subr.bf16.mxu0 0
  %229 = vmatpush1.bf16.msra.mxu0 %v198
  %230 = vmatprep.subr.bf16.mxu0 0
  %231 = vmatpush1.bf16.msra.mxu0 %v197
  %232 = vmatprep.subr.bf16.mxu0 0
  %233 = vmatpush2.bf16.msra.mxu0 0
  %234 = vmatprep.subr.bf16.mxu0 0
  %235 = vmatpush2.bf16.msra.mxu0 0
  %236 = vmatprep.subr.bf16.mxu0 0
  %237 = vmatpush2.bf16.msra.mxu0 0
  %238 = vmatprep.subr.bf16.mxu0 0
  %239 = vmatpush2.bf16.msra.mxu0 0
  %240 = vmatprep.subr.bf16.mxu0 0
  %241 = vmatpush2.bf16.msra.mxu0 0
  %242 = vmatprep.subr.bf16.mxu0 0
  %243 = vmatpush2.bf16.msra.mxu0 0
  %244 = vmatprep.subr.bf16.mxu0 0
  %245 = vmatpush2.bf16.msra.mxu0 0
  %246 = vmatprep.subr.bf16.mxu0 0
  %247 = vmatpush2.bf16.msra.mxu0 0
  %248 = vmatprep.mubr.bf16.mxu0 0
  %249 = vmatmul.mubr.bf16.gmra.mxu0 %v47
  %v250 = vpop.f32.mrf.mxu0
  %v251 = vadd.f32 0.0, %v250
  %v252 = vpop.f32.mrf.mxu0
  %v253 = vpop.f32.mrf.mxu0
  %v254 = vpop.f32.mrf.mxu0
  %255 = vdwg.mxu0
  %256 = vmatprep.subr.bf16.mxu0 0
  %257 = vmatpush1.bf16.msra.mxu0 0
  %258 = vmatprep.subr.bf16.mxu0 0
  %259 = vmatpush1.bf16.msra.mxu0 0
  %260 = vmatprep.subr.bf16.mxu0 0
  %261 = vmatpush1.bf16.msra.mxu0 0
  %262 = vmatprep.subr.bf16.mxu0 0
  %263 = vmatpush1.bf16.msra.mxu0 0
  %264 = vmatprep.subr.bf16.mxu0 0
  %265 = vmatpush1.bf16.msra.mxu0 0
  %266 = vmatprep.subr.bf16.mxu0 0
  %267 = vmatpush1.bf16.msra.mxu0 %v214
  %268 = vmatprep.subr.bf16.mxu0 0
  %269 = vmatpush1.bf16.msra.mxu0 %v198
  %270 = vmatprep.subr.bf16.mxu0 0
  %271 = vmatpush1.bf16.msra.mxu0 %v197
  %272 = vmatprep.subr.bf16.mxu0 0
  %273 = vmatpush2.bf16.msra.mxu0 0
  %274 = vmatprep.subr.bf16.mxu0 0
  %275 = vmatpush2.bf16.msra.mxu0 0
  %276 = vmatprep.subr.bf16.mxu0 0
  %277 = vmatpush2.bf16.msra.mxu0 0
  %278 = vmatprep.subr.bf16.mxu0 0
  %279 = vmatpush2.bf16.msra.mxu0 0
  %280 = vmatprep.subr.bf16.mxu0 0
  %281 = vmatpush2.bf16.msra.mxu0 0
  %282 = vmatprep.subr.bf16.mxu0 0
  %283 = vmatpush2.bf16.msra.mxu0 0
  %284 = vmatprep.subr.bf16.mxu0 0
  %285 = vmatpush2.bf16.msra.mxu0 0
  %286 = vmatprep.subr.bf16.mxu0 0
  %287 = vmatpush2.bf16.msra.mxu0 0
  %288 = vmatprep.mubr.bf16.mxu0 0
  %289 = vmatmul.mubr.bf16.gmra.mxu0 %v94
  %v290 = vpop.f32.mrf.mxu0
  %v291 = vadd.f32 %v251, %v290
  %v292 = vpop.f32.mrf.mxu0
  %v293 = vpop.f32.mrf.mxu0
  %v294 = vpop.f32.mrf.mxu0
  %295 = vdwg.mxu0
  %v297 = vsel %vm49, %v212, 0
  %299 = vmatprep.subr.bf16.mxu0 0
  %300 = vmatpush1.bf16.msra.mxu0 0
  %301 = vmatprep.subr.bf16.mxu0 0
  %302 = vmatpush1.bf16.msra.mxu0 0
  %303 = vmatprep.subr.bf16.mxu0 0
  %304 = vmatpush1.bf16.msra.mxu0 0
  %305 = vmatprep.subr.bf16.mxu0 0
  %306 = vmatpush1.bf16.msra.mxu0 0
  %307 = vmatprep.subr.bf16.mxu0 0
  %308 = vmatpush1.bf16.msra.mxu0 0
  %309 = vmatprep.subr.bf16.mxu0 0
  %310 = vmatpush1.bf16.msra.mxu0 %v297
  %311 = vmatprep.subr.bf16.mxu0 0
  %312 = vmatpush1.bf16.msra.mxu0 %v211
  %313 = vmatprep.subr.bf16.mxu0 0
  %314 = vmatpush1.bf16.msra.mxu0 %v210
  %315 = vmatprep.subr.bf16.mxu0 0
  %316 = vmatpush2.bf16.msra.mxu0 0
  %317 = vmatprep.subr.bf16.mxu0 0
  %318 = vmatpush2.bf16.msra.mxu0 0
  %319 = vmatprep.subr.bf16.mxu0 0
  %320 = vmatpush2.bf16.msra.mxu0 0
  %321 = vmatprep.subr.bf16.mxu0 0
  %322 = vmatpush2.bf16.msra.mxu0 0
  %323 = vmatprep.subr.bf16.mxu0 0
  %324 = vmatpush2.bf16.msra.mxu0 0
  %325 = vmatprep.subr.bf16.mxu0 0
  %326 = vmatpush2.bf16.msra.mxu0 0
  %327 = vmatprep.subr.bf16.mxu0 0
  %328 = vmatpush2.bf16.msra.mxu0 0
  %329 = vmatprep.subr.bf16.mxu0 0
  %330 = vmatpush2.bf16.msra.mxu0 0
  %331 = vmatprep.mubr.bf16.mxu0 0
  %332 = vmatmul.mubr.bf16.gmra.mxu0 %v94
  %v333 = vpop.f32.mrf.mxu0
  %v334 = vadd.f32 0.0, %v333
  %v335 = vpop.f32.mrf.mxu0
  %v336 = vpop.f32.mrf.mxu0
  %v337 = vpop.f32.mrf.mxu0
  %338 = vdwg.mxu0
  %v339 = vadd.f32 %v291, %v334
  %v340 = vadd.f32 %v339, %v183
  %v341 = vmul.f32 %v340, 0.70710677
  %v342 = verf.f32.pop %v341
  %v343 = vmul.f32 %v342, 0.5
  %v344 = vadd.f32 %v343, 0.5
  %v345 = vmul.f32 %v340, %v344
  %v346 = vmax.f32 %v190, %v345
  %s347 = scalar_lea.vmem %s0, 80
  %v348 = vld [vmem:[%s347] sm:$0xff]
  %v349 = vld [vmem:[%s347 + $0x8] sm:$0xff]
  %v350 = vld [vmem:[%s347 + $0x10] sm:$0xff]
  %v351 = vld [vmem:[%s347 + $0x18] sm:$0xff]
  %v352 = vld [vmem:[%s347 + $0x20] sm:$0xf]
  %v353 = vpack.c.bf16 %v349, %v348
  %v354 = vpack.c.bf16 %v351, %v350
  %v355 = vpack.c.bf16 %v352, %v352
  %v356 = vunpack.c.l.bf16 %v353
  %v357 = vunpack.c.h.bf16 %v353
  %v358 = vunpack.c.l.bf16 %v354
  %v359 = vunpack.c.h.bf16 %v354
  %v360 = vunpack.c.l.bf16 %v355
  %v361 = vsub.f32 %v348, %v356
  %v362 = vsub.f32 %v349, %v357
  %v363 = vsub.f32 %v350, %v358
  %v364 = vsub.f32 %v351, %v359
  %v365 = vsub.f32 %v352, %v360
  %v366 = vpack.c.bf16 %v362, %v361
  %v367 = vpack.c.bf16 %v364, %v363
  %v368 = vpack.c.bf16 %v365, %v365
  %v370 = vsel %vm49, %v355, 0
  %372 = vmatprep.subr.bf16.mxu0 0
  %373 = vmatpush1.bf16.msra.mxu0 0
  %374 = vmatprep.subr.bf16.mxu0 0
  %375 = vmatpush1.bf16.msra.mxu0 0
  %376 = vmatprep.subr.bf16.mxu0 0
  %377 = vmatpush1.bf16.msra.mxu0 0
  %378 = vmatprep.subr.bf16.mxu0 0
  %379 = vmatpush1.bf16.msra.mxu0 0
  %380 = vmatprep.subr.bf16.mxu0 0
  %381 = vmatpush1.bf16.msra.mxu0 0
  %382 = vmatprep.subr.bf16.mxu0 0
  %383 = vmatpush1.bf16.msra.mxu0 %v370
  %384 = vmatprep.subr.bf16.mxu0 0
  %385 = vmatpush1.bf16.msra.mxu0 %v354
  %386 = vmatprep.subr.bf16.mxu0 0
  %387 = vmatpush1.bf16.msra.mxu0 %v353
  %388 = vmatprep.subr.bf16.mxu0 0
  %389 = vmatpush2.bf16.msra.mxu0 0
  %390 = vmatprep.subr.bf16.mxu0 0
  %391 = vmatpush2.bf16.msra.mxu0 0
  %392 = vmatprep.subr.bf16.mxu0 0
  %393 = vmatpush2.bf16.msra.mxu0 0
  %394 = vmatprep.subr.bf16.mxu0 0
  %395 = vmatpush2.bf16.msra.mxu0 0
  %396 = vmatprep.subr.bf16.mxu0 0
  %397 = vmatpush2.bf16.msra.mxu0 0
  %398 = vmatprep.subr.bf16.mxu0 0
  %399 = vmatpush2.bf16.msra.mxu0 0
  %400 = vmatprep.subr.bf16.mxu0 0
  %401 = vmatpush2.bf16.msra.mxu0 0
  %402 = vmatprep.subr.bf16.mxu0 0
  %403 = vmatpush2.bf16.msra.mxu0 0
  %404 = vmatprep.mubr.bf16.mxu0 0
  %405 = vmatmul.mubr.bf16.gmra.mxu0 %v47
  %v406 = vpop.f32.mrf.mxu0
  %v407 = vadd.f32 0.0, %v406
  %v408 = vpop.f32.mrf.mxu0
  %v409 = vpop.f32.mrf.mxu0
  %v410 = vpop.f32.mrf.mxu0
  %411 = vdwg.mxu0
  %412 = vmatprep.subr.bf16.mxu0 0
  %413 = vmatpush1.bf16.msra.mxu0 0
  %414 = vmatprep.subr.bf16.mxu0 0
  %415 = vmatpush1.bf16.msra.mxu0 0
  %416 = vmatprep.subr.bf16.mxu0 0
  %417 = vmatpush1.bf16.msra.mxu0 0
  %418 = vmatprep.subr.bf16.mxu0 0
  %419 = vmatpush1.bf16.msra.mxu0 0
  %420 = vmatprep.subr.bf16.mxu0 0
  %421 = vmatpush1.bf16.msra.mxu0 0
  %422 = vmatprep.subr.bf16.mxu0 0
  %423 = vmatpush1.bf16.msra.mxu0 %v370
  %424 = vmatprep.subr.bf16.mxu0 0
  %425 = vmatpush1.bf16.msra.mxu0 %v354
  %426 = vmatprep.subr.bf16.mxu0 0
  %427 = vmatpush1.bf16.msra.mxu0 %v353
  %428 = vmatprep.subr.bf16.mxu0 0
  %429 = vmatpush2.bf16.msra.mxu0 0
  %430 = vmatprep.subr.bf16.mxu0 0
  %431 = vmatpush2.bf16.msra.mxu0 0
  %432 = vmatprep.subr.bf16.mxu0 0
  %433 = vmatpush2.bf16.msra.mxu0 0
  %434 = vmatprep.subr.bf16.mxu0 0
  %435 = vmatpush2.bf16.msra.mxu0 0
  %436 = vmatprep.subr.bf16.mxu0 0
  %437 = vmatpush2.bf16.msra.mxu0 0
  %438 = vmatprep.subr.bf16.mxu0 0
  %439 = vmatpush2.bf16.msra.mxu0 0
  %440 = vmatprep.subr.bf16.mxu0 0
  %441 = vmatpush2.bf16.msra.mxu0 0
  %442 = vmatprep.subr.bf16.mxu0 0
  %443 = vmatpush2.bf16.msra.mxu0 0
  %444 = vmatprep.mubr.bf16.mxu0 0
  %445 = vmatmul.mubr.bf16.gmra.mxu0 %v94
  %v446 = vpop.f32.mrf.mxu0
  %v447 = vadd.f32 %v407, %v446
  %v448 = vpop.f32.mrf.mxu0
  %v449 = vpop.f32.mrf.mxu0
  %v450 = vpop.f32.mrf.mxu0
  %451 = vdwg.mxu0
  %v453 = vsel %vm49, %v368, 0
  %455 = vmatprep.subr.bf16.mxu0 0
  %456 = vmatpush1.bf16.msra.mxu0 0
  %457 = vmatprep.subr.bf16.mxu0 0
  %458 = vmatpush1.bf16.msra.mxu0 0
  %459 = vmatprep.subr.bf16.mxu0 0
  %460 = vmatpush1.bf16.msra.mxu0 0
  %461 = vmatprep.subr.bf16.mxu0 0
  %462 = vmatpush1.bf16.msra.mxu0 0
  %463 = vmatprep.subr.bf16.mxu0 0
  %464 = vmatpush1.bf16.msra.mxu0 0
  %465 = vmatprep.subr.bf16.mxu0 0
  %466 = vmatpush1.bf16.msra.mxu0 %v453
  %467 = vmatprep.subr.bf16.mxu0 0
  %468 = vmatpush1.bf16.msra.mxu0 %v367
  %469 = vmatprep.subr.bf16.mxu0 0
  %470 = vmatpush1.bf16.msra.mxu0 %v366
  %471 = vmatprep.subr.bf16.mxu0 0
  %472 = vmatpush2.bf16.msra.mxu0 0
  %473 = vmatprep.subr.bf16.mxu0 0
  %474 = vmatpush2.bf16.msra.mxu0 0
  %475 = vmatprep.subr.bf16.mxu0 0
  %476 = vmatpush2.bf16.msra.mxu0 0
  %477 = vmatprep.subr.bf16.mxu0 0
  %478 = vmatpush2.bf16.msra.mxu0 0
  %479 = vmatprep.subr.bf16.mxu0 0
  %480 = vmatpush2.bf16.msra.mxu0 0
  %481 = vmatprep.subr.bf16.mxu0 0
  %482 = vmatpush2.bf16.msra.mxu0 0
  %483 = vmatprep.subr.bf16.mxu0 0
  %484 = vmatpush2.bf16.msra.mxu0 0
  %485 = vmatprep.subr.bf16.mxu0 0
  %486 = vmatpush2.bf16.msra.mxu0 0
  %487 = vmatprep.mubr.bf16.mxu0 0
  %488 = vmatmul.mubr.bf16.gmra.mxu0 %v94
  %v489 = vpop.f32.mrf.mxu0
  %v490 = vadd.f32 0.0, %v489
  %v491 = vpop.f32.mrf.mxu0
  %v492 = vpop.f32.mrf.mxu0
  %v493 = vpop.f32.mrf.mxu0
  %494 = vdwg.mxu0
  %v495 = vadd.f32 %v447, %v490
  %v496 = vadd.f32 %v495, %v183
  %v497 = vmul.f32 %v496, 0.70710677
  %v498 = verf.f32.pop %v497
  %v499 = vmul.f32 %v498, 0.5
  %v500 = vadd.f32 %v499, 0.5
  %v501 = vmul.f32 %v496, %v500
  %v502 = vmax.f32 %v346, %v501
  %s503 = scalar_lea.vmem %s0, 120
  %v504 = vld [vmem:[%s503] sm:$0xff]
  %v505 = vld [vmem:[%s503 + $0x8] sm:$0xff]
  %v506 = vld [vmem:[%s503 + $0x10] sm:$0xff]
  %v507 = vld [vmem:[%s503 + $0x18] sm:$0xff]
  %v508 = vld [vmem:[%s503 + $0x20] sm:$0xf]
  %v509 = vpack.c.bf16 %v505, %v504
  %v510 = vpack.c.bf16 %v507, %v506
  %v511 = vpack.c.bf16 %v508, %v508
  %v512 = vunpack.c.l.bf16 %v509
  %v513 = vunpack.c.h.bf16 %v509
  %v514 = vunpack.c.l.bf16 %v510
  %v515 = vunpack.c.h.bf16 %v510
  %v516 = vunpack.c.l.bf16 %v511
  %v517 = vsub.f32 %v504, %v512
  %v518 = vsub.f32 %v505, %v513
  %v519 = vsub.f32 %v506, %v514
  %v520 = vsub.f32 %v507, %v515
  %v521 = vsub.f32 %v508, %v516
  %v522 = vpack.c.bf16 %v518, %v517
  %v523 = vpack.c.bf16 %v520, %v519
  %v524 = vpack.c.bf16 %v521, %v521
  %v526 = vsel %vm49, %v511, 0
  %528 = vmatprep.subr.bf16.mxu0 0
  %529 = vmatpush1.bf16.msra.mxu0 0
  %530 = vmatprep.subr.bf16.mxu0 0
  %531 = vmatpush1.bf16.msra.mxu0 0
  %532 = vmatprep.subr.bf16.mxu0 0
  %533 = vmatpush1.bf16.msra.mxu0 0
  %534 = vmatprep.subr.bf16.mxu0 0
  %535 = vmatpush1.bf16.msra.mxu0 0
  %536 = vmatprep.subr.bf16.mxu0 0
  %537 = vmatpush1.bf16.msra.mxu0 0
  %538 = vmatprep.subr.bf16.mxu0 0
  %539 = vmatpush1.bf16.msra.mxu0 %v526
  %540 = vmatprep.subr.bf16.mxu0 0
  %541 = vmatpush1.bf16.msra.mxu0 %v510
  %542 = vmatprep.subr.bf16.mxu0 0
  %543 = vmatpush1.bf16.msra.mxu0 %v509
  %544 = vmatprep.subr.bf16.mxu0 0
  %545 = vmatpush2.bf16.msra.mxu0 0
  %546 = vmatprep.subr.bf16.mxu0 0
  %547 = vmatpush2.bf16.msra.mxu0 0
  %548 = vmatprep.subr.bf16.mxu0 0
  %549 = vmatpush2.bf16.msra.mxu0 0
  %550 = vmatprep.subr.bf16.mxu0 0
  %551 = vmatpush2.bf16.msra.mxu0 0
  %552 = vmatprep.subr.bf16.mxu0 0
  %553 = vmatpush2.bf16.msra.mxu0 0
  %554 = vmatprep.subr.bf16.mxu0 0
  %555 = vmatpush2.bf16.msra.mxu0 0
  %556 = vmatprep.subr.bf16.mxu0 0
  %557 = vmatpush2.bf16.msra.mxu0 0
  %558 = vmatprep.subr.bf16.mxu0 0
  %559 = vmatpush2.bf16.msra.mxu0 0
  %560 = vmatprep.mubr.bf16.mxu0 0
  %561 = vmatmul.mubr.bf16.gmra.mxu0 %v47
  %v562 = vpop.f32.mrf.mxu0
  %v563 = vadd.f32 0.0, %v562
  %v564 = vpop.f32.mrf.mxu0
  %v565 = vpop.f32.mrf.mxu0
  %v566 = vpop.f32.mrf.mxu0
  %567 = vdwg.mxu0
  %568 = vmatprep.subr.bf16.mxu0 0
  %569 = vmatpush1.bf16.msra.mxu0 0
  %570 = vmatprep.subr.bf16.mxu0 0
  %571 = vmatpush1.bf16.msra.mxu0 0
  %572 = vmatprep.subr.bf16.mxu0 0
  %573 = vmatpush1.bf16.msra.mxu0 0
  %574 = vmatprep.subr.bf16.mxu0 0
  %575 = vmatpush1.bf16.msra.mxu0 0
  %576 = vmatprep.subr.bf16.mxu0 0
  %577 = vmatpush1.bf16.msra.mxu0 0
  %578 = vmatprep.subr.bf16.mxu0 0
  %579 = vmatpush1.bf16.msra.mxu0 %v526
  %580 = vmatprep.subr.bf16.mxu0 0
  %581 = vmatpush1.bf16.msra.mxu0 %v510
  %582 = vmatprep.subr.bf16.mxu0 0
  %583 = vmatpush1.bf16.msra.mxu0 %v509
  %584 = vmatprep.subr.bf16.mxu0 0
  %585 = vmatpush2.bf16.msra.mxu0 0
  %586 = vmatprep.subr.bf16.mxu0 0
  %587 = vmatpush2.bf16.msra.mxu0 0
  %588 = vmatprep.subr.bf16.mxu0 0
  %589 = vmatpush2.bf16.msra.mxu0 0
  %590 = vmatprep.subr.bf16.mxu0 0
  %591 = vmatpush2.bf16.msra.mxu0 0
  %592 = vmatprep.subr.bf16.mxu0 0
  %593 = vmatpush2.bf16.msra.mxu0 0
  %594 = vmatprep.subr.bf16.mxu0 0
  %595 = vmatpush2.bf16.msra.mxu0 0
  %596 = vmatprep.subr.bf16.mxu0 0
  %597 = vmatpush2.bf16.msra.mxu0 0
  %598 = vmatprep.subr.bf16.mxu0 0
  %599 = vmatpush2.bf16.msra.mxu0 0
  %600 = vmatprep.mubr.bf16.mxu0 0
  %601 = vmatmul.mubr.bf16.gmra.mxu0 %v94
  %v602 = vpop.f32.mrf.mxu0
  %v603 = vadd.f32 %v563, %v602
  %v604 = vpop.f32.mrf.mxu0
  %v605 = vpop.f32.mrf.mxu0
  %v606 = vpop.f32.mrf.mxu0
  %607 = vdwg.mxu0
  %v609 = vsel %vm49, %v524, 0
  %611 = vmatprep.subr.bf16.mxu0 0
  %612 = vmatpush1.bf16.msra.mxu0 0
  %613 = vmatprep.subr.bf16.mxu0 0
  %614 = vmatpush1.bf16.msra.mxu0 0
  %615 = vmatprep.subr.bf16.mxu0 0
  %616 = vmatpush1.bf16.msra.mxu0 0
  %617 = vmatprep.subr.bf16.mxu0 0
  %618 = vmatpush1.bf16.msra.mxu0 0
  %619 = vmatprep.subr.bf16.mxu0 0
  %620 = vmatpush1.bf16.msra.mxu0 0
  %621 = vmatprep.subr.bf16.mxu0 0
  %622 = vmatpush1.bf16.msra.mxu0 %v609
  %623 = vmatprep.subr.bf16.mxu0 0
  %624 = vmatpush1.bf16.msra.mxu0 %v523
  %625 = vmatprep.subr.bf16.mxu0 0
  %626 = vmatpush1.bf16.msra.mxu0 %v522
  %627 = vmatprep.subr.bf16.mxu0 0
  %628 = vmatpush2.bf16.msra.mxu0 0
  %629 = vmatprep.subr.bf16.mxu0 0
  %630 = vmatpush2.bf16.msra.mxu0 0
  %631 = vmatprep.subr.bf16.mxu0 0
  %632 = vmatpush2.bf16.msra.mxu0 0
  %633 = vmatprep.subr.bf16.mxu0 0
  %634 = vmatpush2.bf16.msra.mxu0 0
  %635 = vmatprep.subr.bf16.mxu0 0
  %636 = vmatpush2.bf16.msra.mxu0 0
  %637 = vmatprep.subr.bf16.mxu0 0
  %638 = vmatpush2.bf16.msra.mxu0 0
  %639 = vmatprep.subr.bf16.mxu0 0
  %640 = vmatpush2.bf16.msra.mxu0 0
  %641 = vmatprep.subr.bf16.mxu0 0
  %642 = vmatpush2.bf16.msra.mxu0 0
  %643 = vmatprep.mubr.bf16.mxu0 0
  %644 = vmatmul.mubr.bf16.gmra.mxu0 %v94
  %v645 = vpop.f32.mrf.mxu0
  %v646 = vadd.f32 0.0, %v645
  %v647 = vpop.f32.mrf.mxu0
  %v648 = vpop.f32.mrf.mxu0
  %v649 = vpop.f32.mrf.mxu0
  %650 = vdwg.mxu0
  %v651 = vadd.f32 %v603, %v646
  %v652 = vadd.f32 %v651, %v183
  %v653 = vmul.f32 %v652, 0.70710677
  %v654 = verf.f32.pop %v653
  %v655 = vmul.f32 %v654, 0.5
  %v656 = vadd.f32 %v655, 0.5
  %v657 = vmul.f32 %v652, %v656
  %v658 = vmax.f32 %v502, %v657
  %659 = vst [vmem:[%s4] sm:$0xff] %v658
  %s660 = smul.u32 0, 128
  %v661 = vlaneseq
  %v662 = vand.u32 %v661, 127
  %v663 = vstv %s660
  %v664 = vadd.s32 %v663, %v662
  %vm665 = vcmp.lt.s32.totalorder %v664, 128
  %v666 = vsel %vm665, 1, 0
  %v667 = vcvt.s32.f32 %v666
  %v668 = vmul.f32 %v658, %v667
  %669 = vadd.xlane.f32.xlu0 %v668
  %v670 = vpop.xlane.xlu0 %669
  %vm671 = vcmask 7168
  %672 = vst.msk [vmem:[%s5] sm:$0xff] %vm671, %v670
  %v673 = vmul.f32 %v668, %v658
  %674 = vadd.xlane.f32.xlu0 %v673
  %v675 = vpop.xlane.xlu0 %674
  %676 = vst.msk [vmem:[%s6] sm:$0xff] %vm671, %v675
  // Predicated region
  $region18: #{conv_block_forward.2} parent=0 // pred_check
    _
  $region19: #{conv_block_forward.2} parent=0 // pred_check_branch
    %678 = sbr.rel (0) target = $region21
  $region20: #{conv_block_forward.2} parent=0 // pred_region
    _
  $region21: #{conv_block_forward.2} parent=0 // pred_fallthru
    _
  // Predicated region
  $region22: #{conv_block_forward.2} parent=0 // pred_check
    _
  $region23: #{conv_block_forward.2} parent=0 // pred_check_branch
    %680 = sbr.rel (0) target = $region25
  $region24: #{conv_block_forward.2} parent=0 // pred_region
    _
  $region25: #{conv_block_forward.2} parent=0 // pred_fallthru
    _
  // Predicated region
  $region26: #{conv_block_forward.2} parent=0 // pred_check
    _
  $region27: #{conv_block_forward.2} parent=0 // pred_check_branch
    %682 = sbr.rel (0) target = $region29
  $region28: #{conv_block_forward.2} parent=0 // pred_region
    _
  $region29: #{conv_block_forward.2} parent=0 // pred_fallthru
    _
  // Predicated region
  $region30: #{conv_block_forward.2} parent=0 // pred_check
    _
  $region31: #{conv_block_forward.2} parent=0 // pred_check_branch
    %684 = sbr.rel (0) target = $region33
  $region32: #{conv_block_forward.2} parent=0 // pred_region
    _
  $region33: #{conv_block_forward.2} parent=0 // pred_fallthru
    _
  // Predicated region
  $region34: #{conv_block_forward.2} parent=0 // pred_check
    _
  $region35: #{conv_block_forward.2} parent=0 // pred_check_branch
    %686 = sbr.rel (0) target = $region37
  $region36: #{conv_block_forward.2} parent=0 // pred_region
    _
  $region37: #{conv_block_forward.2} parent=0 // pred_fallthru
    _
  // Predicated region
  $region38: #{conv_block_forward.2} parent=0 // pred_check
    _
  $region39: #{conv_block_forward.2} parent=0 // pred_check_branch
    %688 = sbr.rel (0) target = $region41
  $region40: #{conv_block_forward.2} parent=0 // pred_region
    _
  $region41: #{conv_block_forward.2} parent=0 // pred_fallthru
    _

// kernel: conv_block_forward.3
$region0: #{conv_block_forward.3}
  #allocation0 [shape = 'u32[]', space=smem, size = 0x4, offset = 0x4, fixed_abs, tag = 'smem constant byte address 0x4 - core index']
  #allocation1 [shape = 'u32[144,128]{1,0:T(1,128)}', space=vmem, size = 0x12000, scoped, tag = 'internal scratch']
  %s0 = inlined_call_operand.vmem [shape: f32[1,8,1], index: 0, kind: input, shape index: {}]
  %s1 = inlined_call_operand.vmem [shape: f32[1,8,1], index: 1, kind: input, shape index: {}]
  %s2 = inlined_call_operand.vmem [shape: f32[8,128], index: 2, kind: input, shape index: {}]
  %s3 = inlined_call_operand.vmem [shape: f32[8,128], index: 3, kind: output, shape index: {}]
  %s4 = sld [smem:[#allocation0]]
  $region22: #{conv_block_forward.3} parent=0
    _
  %s6 = ssub.s32 1, %s4
  %s7 = scalar_select 0, %s6, %s4
  // Predicated region
  $region2: #{conv_block_forward.3} parent=0 // pred_check
    _
  $region3: #{conv_block_forward.3} parent=0 // pred_check_branch
    %9 = sbr.rel (0) target = $region5
  $region4: #{conv_block_forward.3} parent=0 // pred_region
    _
  $region5: #{conv_block_forward.3} parent=0 // pred_fallthru
    _
  // Predicated region
  $region6: #{conv_block_forward.3} parent=0 // pred_check
    _
  $region7: #{conv_block_forward.3} parent=0 // pred_check_branch
    %11 = sbr.rel (0) target = $region9
  $region8: #{conv_block_forward.3} parent=0 // pred_region
    _
  $region9: #{conv_block_forward.3} parent=0 // pred_fallthru
    _
  // Predicated region
  $region10: #{conv_block_forward.3} parent=0 // pred_check
    _
  $region11: #{conv_block_forward.3} parent=0 // pred_check_branch
    %13 = sbr.rel (0) target = $region13
  $region12: #{conv_block_forward.3} parent=0 // pred_region
    _
  $region13: #{conv_block_forward.3} parent=0 // pred_fallthru
    _
  %v14 = vld [vmem:[%s0] sm:$0xff]
  %v15 = vadd.f32 %v14, 0.0
  %v16 = vmul.f32 %v15, 0.0078125
  %v17 = vld [vmem:[%s1] sm:$0xff]
  %v18 = vadd.f32 %v17, 0.0
  %v19 = vmul.f32 %v18, 0.0078125
  %v20 = vmul.f32 %v16, %v16
  %v21 = vsub.f32 %v19, %v20
  %v22 = vadd.f32 %v21, 1e-05
  %v23 = vrsqrt.pop %v22
  %v24 = vld [vmem:[%s2] sm:$0xff]
  %26 = vset.pattern.permute.xlu0 0
  %27 = vperm.xlu0 %26, %v16
  %v28 = vpop.permute.xlu0 %27
  %v30 = vsub.f32 %v24, %v28
  %32 = vset.pattern.permute.xlu0 0
  %33 = vperm.xlu0 %32, %v23
  %v34 = vpop.permute.xlu0 %33
  %v36 = vmul.f32 %v30, %v34
  %37 = vst [vmem:[%s3] sm:$0xff] %v36
  // Predicated region
  $region14: #{conv_block_forward.3} parent=0 // pred_check
    _
  $region15: #{conv_block_forward.3} parent=0 // pred_check_branch
    %39 = sbr.rel (0) target = $region17
  $region16: #{conv_block_forward.3} parent=0 // pred_region
    _
  $region17: #{conv_block_forward.3} parent=0 // pred_fallthru
    _
  // Predicated region
  $region18: #{conv_block_forward.3} parent=0 // pred_check
    _
  $region19: #{conv_block_forward.3} parent=0 // pred_check_branch
    %41 = sbr.rel (0) target = $region21
  $region20: #{conv_block_forward.3} parent=0 // pred_region
    _
  $region21: #{conv_block_forward.3} parent=0 // pred_fallthru
    _

</llo_original>
